<compile_context>
chip_gen: v5e
topology: v5e:2x2
jax: 0.10.0
libtpu: 0.0.40
codegen_flags: <defaults>
</compile_context>

<pallas_src>
import jax
import jax.numpy as jnp
from jax.experimental import pallas as pl
from jax.experimental.pallas import tpu as pltpu


def _round_up(x, m):
    return (x + m - 1) // m * m


def _vmem_limit_bytes():
    """Generation-aware VMEM budget (v5e/v6e: 128 MiB physical, v7x: 64 MiB)."""
    try:
        cap = getattr(pltpu.get_tpu_info(), "vmem_capacity_bytes", None)
    except Exception:
        cap = None
    if not cap:
        cap = 64 << 20                      # conservative default (v7x per-core VMEM)
    return int(max(32 << 20, min(cap - (16 << 20), 96 << 20)))


def _plan_tiles(B, n, g_esize, aux_bytes_per_row, budget_bytes, gran):
    """Pick (tile_b, tile_r, n_pad): the per-step g slab is (tile_b, tile_r, n_pad)."""
    n_pad = _round_up(n, gran)
    per_batch = n_pad * n_pad * g_esize + n_pad * aux_bytes_per_row
    if per_batch <= budget_bytes:
        # block over batch, rows untiled: amortizes per-step overhead for small n
        tile_b = 1
        for d in range(min(B, max(1, budget_bytes // per_batch)), 0, -1):
            if B % d == 0:
                tile_b = d
                break
        return tile_b, n_pad, n_pad
    # a single batch element's g does not fit the per-buffer budget: tile its rows
    row_budget = max(budget_bytes - n_pad * aux_bytes_per_row, gran * n_pad * g_esize)
    rows_fit = max(gran, (row_budget // (n_pad * g_esize)) // gran * gran)
    num_r = -(-n_pad // rows_fit)
    tile_r = _round_up(-(-n_pad // num_r), gran)
    return 1, tile_r, tile_r * num_r


# ---------------------------------------------------------------------------
# Stage B: global normalization + FF head (tiny; runs exactly once).
# ---------------------------------------------------------------------------
def ff_kernel(packed_ref, w1_ref, b1_ref, w2_ref, b2_ref, out_ref):
    packed = packed_ref[...].astype(jnp.float32)            # [B, 2E+1]
    two_e = packed.shape[-1] - 1
    total = jnp.sum(packed[:, two_e:])                       # global g_output.sum()
    feat_agg = packed[:, :two_e] / total                     # [B, 2E]
    h = jnp.dot(feat_agg, w1_ref[...], preferred_element_type=jnp.float32) + b1_ref[...]
    h = jnp.maximum(h, 0.0)
    out_ref[...] = (jnp.dot(h, w2_ref[...], preferred_element_type=jnp.float32)
                    + b2_ref[...]).astype(out_ref.dtype)


def gnn_w_enc(inputs, g_output, params, *, tile_b=None, tile_rows=None):
    """inputs: [B, n, feature_num]; g_output: [B, n, n]  ->  w: [B, w_dim]."""
    B, n, F = inputs.shape
    w_emb, b_emb, w1, b1, w2, b2 = params
    E = w_emb.shape[1]
    w_dim = w2.shape[1]
    assert g_output.shape == (B, n, n)

    # The dominant HBM stream (g) and x stay in their source dtype (bf16 halves the
    # g traffic); the kernel upcasts per-tile and accumulates in f32.
    g = g_output
    x = inputs
    g_esize = jnp.dtype(g.dtype).itemsize
    x_esize = jnp.dtype(x.dtype).itemsize
    gran = {4: 8, 2: 16, 1: 32}.get(g_esize, 8)     # sublane packing of the g dtype

    vmem_limit = _vmem_limit_bytes()
    g_buf_budget = max(4 << 20, vmem_limit // 4)    # per g buffer; Pallas double-buffers
    aux_per_row = 2 * F * x_esize + 4 * E + 8       # resident x + feat scratch + col_acc
    tb, tr, n_pad = _plan_tiles(B, n, g_esize, aux_per_row, g_buf_budget, gran)

    if tile_rows is not None:
        assert tile_rows % gran == 0 or tile_rows >= n, (
            f"tile_rows must be a multiple of {gran} for {g.dtype} g, or >= n")
        tr = tile_rows
        n_pad = _round_up(n, tr)
    if tile_b is not None:
        assert B % tile_b == 0, "tile_b must divide the batch"
        tb = tile_b

    if n_pad != n:
        # zero gate rows/cols contribute nothing to any sum -> results unchanged
        g = jnp.pad(g, ((0, 0), (0, n_pad - n), (0, n_pad - n)))
        x = jnp.pad(x, ((0, 0), (0, n_pad - n), (0, 0)))

    num_bb, num_r = B // tb, n_pad // tr
    pack = 2 * E + 1                                 # [col-half | row-half | g-sum]

    # -----------------------------------------------------------------------
    # Stage A (fused): node embedding + weighted pairwise aggregation.
    # -----------------------------------------------------------------------
    def agg_kernel(x_ref, we_ref, be_ref, g_ref, out_ref, feat_scr, col_acc, rw_acc):
        r = pl.program_id(1)

        @pl.when(r == 0)
        def _init():
            # Fused stage 1 (GT placeholder): node embedding for this batch block,
            # computed once per batch block and kept resident in VMEM scratch.
            xb = x_ref[...].astype(jnp.float32)                         # [tb, n_pad, F]
            wb = jnp.broadcast_to(we_ref[...].astype(jnp.float32), (tb, F, E))
            feat = jnp.einsum("bnf,bfe->bne", xb, wb,
                              preferred_element_type=jnp.float32)
            feat_scr[...] = feat + be_ref[...].astype(jnp.float32)      # [tb, n_pad, E]
            col_acc[...] = jnp.zeros_like(col_acc)
            rw_acc[...] = jnp.zeros_like(rw_acc)

        g_blk = g_ref[...].astype(jnp.float32)                          # [tb, tr, n_pad]
        # colsum(g[b]) half: accumulate column sums of this row tile in f32.
        col_acc[...] += jnp.sum(g_blk, axis=1, keepdims=True)           # [tb, 1, n_pad]
        # rowsum(g[b])-weighted features for the rows of this tile.
        row_start = pl.multiple_of(r * tr, tr)
        ft = feat_scr[:, pl.ds(row_start, tr), :]                       # [tb, tr, E]
        row_w = jnp.sum(g_blk, axis=2, keepdims=True)                   # [tb, tr, 1]
        rw_acc[...] += jnp.sum(row_w * ft, axis=1, keepdims=True)       # [tb, 1, E]

        @pl.when(r == pl.num_programs(1) - 1)
        def _finalize():
            first = jnp.einsum("bkn,bne->bke", col_acc[...], feat_scr[...],
                               preferred_element_type=jnp.float32)      # [tb, 1, E]
            gsum = jnp.sum(col_acc[...], axis=-1, keepdims=True)        # [tb, 1, 1]
            out_ref[...] = jnp.concatenate([first, rw_acc[...], gsum], axis=-1)

    g_tile_bytes = tb * tr * n_pad * g_esize
    g_spec_kwargs = {}
    if num_r > 2 and g_tile_bytes < (8 << 20):
        # deeper buffering hides DMA latency when the VMEM cap forces small slabs (v7x)
        g_spec_kwargs["pipeline_mode"] = pl.Buffered(3)
    g_spec = pl.BlockSpec((tb, tr, n_pad), lambda bb, r: (bb, r, 0), **g_spec_kwargs)

    cost = pl.CostEstimate(
        flops=int(2 * B * n_pad * F * E + 3 * B * n_pad * n_pad + 4 * B * n_pad * E),
        transcendentals=0,
        bytes_accessed=int(B * n_pad * n_pad * g_esize + B * n_pad * F * x_esize
                           + B * pack * 4),
    )

    packed = pl.pallas_call(
        agg_kernel,
        out_shape=jax.ShapeDtypeStruct((B, 1, pack), jnp.float32),
        grid_spec=pltpu.PrefetchScalarGridSpec(
            num_scalar_prefetch=0,
            grid=(num_bb, num_r),                                   # reduction axis last
            in_specs=[
                pl.BlockSpec((tb, n_pad, F), lambda bb, r: (bb, 0, 0)),  # x (resident over r)
                pl.BlockSpec((F, E), lambda bb, r: (0, 0)),              # emb weight
                pl.BlockSpec((1, E), lambda bb, r: (0, 0)),              # emb bias
                g_spec,                                                  # dominant g stream
            ],
            out_specs=pl.BlockSpec((tb, 1, pack), lambda bb, r: (bb, 0, 0)),
            scratch_shapes=[
                pltpu.VMEM((tb, n_pad, E), jnp.float32),   # fused node embeddings
                pltpu.VMEM((tb, 1, n_pad), jnp.float32),   # column-sum accumulator
                pltpu.VMEM((tb, 1, E), jnp.float32),       # row-sum-weighted accumulator
            ],
        ),
        compiler_params=pltpu.CompilerParams(
            dimension_semantics=("parallel", "arbitrary"),   # batch blocks -> megacore
            vmem_limit_bytes=vmem_limit,
        ),
        cost_estimate=cost,
    )(x, w_emb, b_emb.reshape(1, E), g)

    # ---- Stage B: global 1/g.sum() + FF head (tiny, single block) ----
    vmem = pl.BlockSpec(memory_space=pltpu.MemorySpace.VMEM)
    w = pl.pallas_call(
        ff_kernel,
        out_shape=jax.ShapeDtypeStruct((B, w_dim), jnp.float32),
        in_specs=[vmem] * 5,
        out_specs=vmem,
    )(packed.reshape(B, pack), w1, b1.reshape(1, -1), w2, b2.reshape(1, -1))
    return w


def init_params(key, feature_num, emb_dim, w_dim):
    E = emb_dim
    ks = jax.random.split(key, 6)
    w_emb = jax.random.normal(ks[0], (feature_num, E), jnp.float32) * 0.1
    b_emb = jax.random.normal(ks[1], (E,), jnp.float32) * 0.1
    # FF(2E, w_dim, 4E, bias=True); weights stored [in, out] (transposed vs torch).
    w1 = jax.random.normal(ks[2], (2 * E, 4 * E), jnp.float32) * 0.1
    b1 = jax.random.normal(ks[3], (4 * E,), jnp.float32) * 0.1
    w2 = jax.random.normal(ks[4], (4 * E, w_dim), jnp.float32) * 0.1
    b2 = jax.random.normal(ks[5], (w_dim,), jnp.float32) * 0.1
    return (w_emb, b_emb, w1, b1, w2, b2)


if __name__ == "__main__":
    key = jax.random.PRNGKey(0)
    k_x, k_g, k_p = jax.random.split(key, 3)

    B, n, feature_num = 2, 32, 4
    emb_dim, w_dim = 8, 8

    inputs = jax.random.normal(k_x, (B, n, feature_num), jnp.float32)
    # strictly positive gate so g.sum() != 0; streamed in bf16 (halves the dominant
    # HBM traffic -- the kernel upcasts per-tile and accumulates in f32).
    g_output = jax.nn.sigmoid(
        jax.random.normal(k_g, (B, n, n), jnp.float32)).astype(jnp.bfloat16)
    params = init_params(k_p, feature_num, emb_dim, w_dim)

    # Forced small tiles exercise the multi-step accumulate/finalize path
    # (grid = 2 batch blocks x 2 row tiles); the auto plan uses a single slab here.
    w = gnn_w_enc(inputs, g_output, params, tile_b=1, tile_rows=16)
    jax.block_until_ready(w)
    w_auto = gnn_w_enc(inputs, g_output, params)
    jax.block_until_ready(w_auto)

    # Plain-JAX reference replicating the PyTorch forward (same GT/FF placeholders).
    w_emb, b_emb, w1, b1, w2, b2 = params
    g32 = g_output.astype(jnp.float32)
    feat = jnp.einsum("bnf,fe->bne", inputs, w_emb) + b_emb
    pair = jnp.concatenate(
        [jnp.broadcast_to(feat[:, None, :, :], (B, n, n, emb_dim)),
         jnp.broadcast_to(feat[:, :, None, :], (B, n, n, emb_dim))],
        axis=-1)
    feat_agg = (pair * g32[..., None]).sum((1, 2)) / g32.sum()
    ref = jnp.maximum(feat_agg @ w1 + b1, 0.0) @ w2 + b2

    assert w.shape == (B, w_dim)
    assert jnp.allclose(w, ref, atol=2e-3, rtol=2e-3), (w, ref)
    assert jnp.allclose(w_auto, ref, atol=2e-3, rtol=2e-3), (w_auto, ref)
    print("KERNEL_OK")
</pallas_src>

<mosaic_0001>
module attributes {stable_mosaic.version = 11 : i64} {
  func.func @agg_kernel(%arg0: i32, %arg1: i32, %arg2: memref<1x32x4xf32, #tpu.memory_space<vmem>>, %arg3: memref<4x8xf32, #tpu.memory_space<vmem>>, %arg4: memref<1x8xf32, #tpu.memory_space<vmem>>, %arg5: memref<1x16x32xbf16, #tpu.memory_space<vmem>>, %arg6: memref<1x1x17xf32, #tpu.memory_space<vmem>>, %arg7: memref<1x32x8xf32, #tpu.memory_space<vmem>>, %arg8: memref<1x1x32xf32, #tpu.memory_space<vmem>>, %arg9: memref<1x1x8xf32, #tpu.memory_space<vmem>>) attributes {dimension_semantics = [#tpu.dimension_semantics<parallel>, #tpu.dimension_semantics<arbitrary>], iteration_bounds = array<i64: 2, 2>, scalar_prefetch = 0 : i64, scratch_operands = 3 : i64, tpu.core_type = #tpu.core_type<tc>, window_params = [{transform_indices = @transform_0, window_bounds = array<i64: 1, 32, 4>}, {pipeline_mode = #tpu.pipeline_mode<synchronous>, transform_indices = @transform_1, window_bounds = array<i64: 4, 8>}, {pipeline_mode = #tpu.pipeline_mode<synchronous>, transform_indices = @transform_2, window_bounds = array<i64: 1, 8>}, {transform_indices = @transform_3, window_bounds = array<i64: 1, 16, 32>}, {transform_indices = @transform_4, window_bounds = array<i64: 1, 1, 17>}]} {
    %c0_i32 = arith.constant 0 : i32
    %0 = arith.cmpi eq, %arg1, %c0_i32 : i32
    %1 = arith.extui %0 : i1 to i32
    %c0_i32_0 = arith.constant 0 : i32
    %2 = arith.cmpi ne, %1, %c0_i32_0 : i32
    scf.if %2 {
      %c0_20 = arith.constant 0 : index
      %c0_21 = arith.constant 0 : index
      %c0_22 = arith.constant 0 : index
      %26 = vector.load %arg2[%c0_20, %c0_21, %c0_22] : memref<1x32x4xf32, #tpu.memory_space<vmem>>, vector<1x32x4xf32>
      %c0_23 = arith.constant 0 : index
      %c0_24 = arith.constant 0 : index
      %27 = vector.load %arg3[%c0_23, %c0_24] : memref<4x8xf32, #tpu.memory_space<vmem>>, vector<4x8xf32>
      %28 = vector.shape_cast %27 : vector<4x8xf32> to vector<1x4x8xf32>
      "tpu.trace_start"() <{level = 10 : i32, message = "bnf,bfe->bne"}> : () -> ()
      %cst_25 = arith.constant dense<0.000000e+00> : vector<1x32x8xf32>
      %29 = tpu.matmul %26, %28, %cst_25 {dimension_numbers = #tpu.dot_dimension_numbers<[2], [1], [1], [2], [0, 0, 0, 1, 1, 2], [0], [0]>} : vector<1x32x4xf32>, vector<1x4x8xf32>, vector<1x32x8xf32> -> vector<1x32x8xf32>
      "tpu.trace_stop"() : () -> ()
      %c0_26 = arith.constant 0 : index
      %c0_27 = arith.constant 0 : index
      %30 = vector.load %arg4[%c0_26, %c0_27] : memref<1x8xf32, #tpu.memory_space<vmem>>, vector<1x8xf32>
      %31 = vector.shape_cast %30 : vector<1x8xf32> to vector<1x1x8xf32>
      %32 = vector.broadcast %31 : vector<1x1x8xf32> to vector<1x32x8xf32>
      %33 = arith.addf %29, %32 : vector<1x32x8xf32>
      %c0_28 = arith.constant 0 : index
      %c0_29 = arith.constant 0 : index
      %c0_30 = arith.constant 0 : index
      %34 = vector.load %arg7[%c0_28, %c0_29, %c0_30] : memref<1x32x8xf32, #tpu.memory_space<vmem>>, vector<1x32x8xf32>
      tpu.vector_store %arg7[%c0_28, %c0_29, %c0_30], %33 {strides = array<i32>} : memref<1x32x8xf32, #tpu.memory_space<vmem>>, vector<1x32x8xf32>,
      %cst_31 = arith.constant 0.000000e+00 : f32
      %35 = vector.broadcast %cst_31 : f32 to vector<1x1x32xf32>
      %c0_32 = arith.constant 0 : index
      %c0_33 = arith.constant 0 : index
      %c0_34 = arith.constant 0 : index
      %36 = vector.load %arg8[%c0_32, %c0_33, %c0_34] : memref<1x1x32xf32, #tpu.memory_space<vmem>>, vector<1x1x32xf32>
      tpu.vector_store %arg8[%c0_32, %c0_33, %c0_34], %35 {strides = array<i32>} : memref<1x1x32xf32, #tpu.memory_space<vmem>>, vector<1x1x32xf32>,
      %cst_35 = arith.constant 0.000000e+00 : f32
      %37 = vector.broadcast %cst_35 : f32 to vector<1x1x8xf32>
      %c0_36 = arith.constant 0 : index
      %c0_37 = arith.constant 0 : index
      %c0_38 = arith.constant 0 : index
      %38 = vector.load %arg9[%c0_36, %c0_37, %c0_38] : memref<1x1x8xf32, #tpu.memory_space<vmem>>, vector<1x1x8xf32>
      tpu.vector_store %arg9[%c0_36, %c0_37, %c0_38], %37 {strides = array<i32>} : memref<1x1x8xf32, #tpu.memory_space<vmem>>, vector<1x1x8xf32>,
    } else {
    }
    %c0 = arith.constant 0 : index
    %c0_1 = arith.constant 0 : index
    %c0_2 = arith.constant 0 : index
    %3 = vector.load %arg5[%c0, %c0_1, %c0_2] : memref<1x16x32xbf16, #tpu.memory_space<vmem>>, vector<1x16x32xbf16>
    %4 = arith.extf %3 : vector<1x16x32xbf16> to vector<1x16x32xf32>
    %c0_3 = arith.constant 0 : index
    %c0_4 = arith.constant 0 : index
    %c0_5 = arith.constant 0 : index
    %5 = vector.load %arg8[%c0_3, %c0_4, %c0_5] : memref<1x1x32xf32, #tpu.memory_space<vmem>>, vector<1x1x32xf32>
    %cst = arith.constant dense<0.000000e+00> : vector<1x32xf32>
    %6 = vector.multi_reduction <add>, %4, %cst [1] : vector<1x16x32xf32> to vector<1x32xf32>
    %7 = vector.shape_cast %6 : vector<1x32xf32> to vector<1x1x32xf32>
    %8 = arith.addf %5, %7 : vector<1x1x32xf32>
    %c0_6 = arith.constant 0 : index
    %c0_7 = arith.constant 0 : index
    %c0_8 = arith.constant 0 : index
    %9 = vector.load %arg8[%c0_6, %c0_7, %c0_8] : memref<1x1x32xf32, #tpu.memory_space<vmem>>, vector<1x1x32xf32>
    tpu.vector_store %arg8[%c0_6, %c0_7, %c0_8], %8 {strides = array<i32>} : memref<1x1x32xf32, #tpu.memory_space<vmem>>, vector<1x1x32xf32>,
    %c16_i32 = arith.constant 16 : i32
    %10 = arith.muli %arg1, %c16_i32 : i32
    %11 = tpu.assume_multiple %10, 16 : i32
    %c0_9 = arith.constant 0 : index
    %12 = arith.index_cast %11 : i32 to index
    %c0_10 = arith.constant 0 : index
    %13 = vector.load %arg7[%c0_9, %12, %c0_10] : memref<1x32x8xf32, #tpu.memory_space<vmem>>, vector<1x16x8xf32>
    %cst_11 = arith.constant dense<0.000000e+00> : vector<1x16xf32>
    %14 = vector.multi_reduction <add>, %4, %cst_11 [2] : vector<1x16x32xf32> to vector<1x16xf32>
    %15 = vector.shape_cast %14 : vector<1x16xf32> to vector<1x16x1xf32>
    %c0_12 = arith.constant 0 : index
    %c0_13 = arith.constant 0 : index
    %c0_14 = arith.constant 0 : index
    %16 = vector.load %arg9[%c0_12, %c0_13, %c0_14] : memref<1x1x8xf32, #tpu.memory_space<vmem>>, vector<1x1x8xf32>
    %17 = vector.broadcast %15 : vector<1x16x1xf32> to vector<1x16x8xf32>
    %18 = arith.mulf %17, %13 : vector<1x16x8xf32>
    %cst_15 = arith.constant dense<0.000000e+00> : vector<1x8xf32>
    %19 = vector.multi_reduction <add>, %18, %cst_15 [1] : vector<1x16x8xf32> to vector<1x8xf32>
    %20 = vector.shape_cast %19 : vector<1x8xf32> to vector<1x1x8xf32>
    %21 = arith.addf %16, %20 : vector<1x1x8xf32>
    %c0_16 = arith.constant 0 : index
    %c0_17 = arith.constant 0 : index
    %c0_18 = arith.constant 0 : index
    %22 = vector.load %arg9[%c0_16, %c0_17, %c0_18] : memref<1x1x8xf32, #tpu.memory_space<vmem>>, vector<1x1x8xf32>
    tpu.vector_store %arg9[%c0_16, %c0_17, %c0_18], %21 {strides = array<i32>} : memref<1x1x8xf32, #tpu.memory_space<vmem>>, vector<1x1x8xf32>,
    %c1_i32 = arith.constant 1 : i32
    %23 = arith.cmpi eq, %arg1, %c1_i32 : i32
    %24 = arith.extui %23 : i1 to i32
    %c0_i32_19 = arith.constant 0 : i32
    %25 = arith.cmpi ne, %24, %c0_i32_19 : i32
    scf.if %25 {
      %c0_20 = arith.constant 0 : index
      %c0_21 = arith.constant 0 : index
      %c0_22 = arith.constant 0 : index
      %26 = vector.load %arg8[%c0_20, %c0_21, %c0_22] : memref<1x1x32xf32, #tpu.memory_space<vmem>>, vector<1x1x32xf32>
      %c0_23 = arith.constant 0 : index
      %c0_24 = arith.constant 0 : index
      %c0_25 = arith.constant 0 : index
      %27 = vector.load %arg7[%c0_23, %c0_24, %c0_25] : memref<1x32x8xf32, #tpu.memory_space<vmem>>, vector<1x32x8xf32>
      "tpu.trace_start"() <{level = 10 : i32, message = "bkn,bne->bke"}> : () -> ()
      %cst_26 = arith.constant dense<0.000000e+00> : vector<1x1x8xf32>
      %28 = tpu.matmul %26, %27, %cst_26 {dimension_numbers = #tpu.dot_dimension_numbers<[2], [1], [1], [2], [0, 0, 0, 1, 1, 2], [0], [0]>} : vector<1x1x32xf32>, vector<1x32x8xf32>, vector<1x1x8xf32> -> vector<1x1x8xf32>
      "tpu.trace_stop"() : () -> ()
      %c0_27 = arith.constant 0 : index
      %c0_28 = arith.constant 0 : index
      %c0_29 = arith.constant 0 : index
      %29 = vector.load %arg8[%c0_27, %c0_28, %c0_29] : memref<1x1x32xf32, #tpu.memory_space<vmem>>, vector<1x1x32xf32>
      %cst_30 = arith.constant dense<0.000000e+00> : vector<1x1xf32>
      %30 = vector.multi_reduction <add>, %29, %cst_30 [2] : vector<1x1x32xf32> to vector<1x1xf32>
      %31 = vector.shape_cast %30 : vector<1x1xf32> to vector<1x1x1xf32>
      %c0_31 = arith.constant 0 : index
      %c0_32 = arith.constant 0 : index
      %c0_33 = arith.constant 0 : index
      %32 = vector.load %arg9[%c0_31, %c0_32, %c0_33] : memref<1x1x8xf32, #tpu.memory_space<vmem>>, vector<1x1x8xf32>
      %33 = tpu.concatenate %28, %32, %31 in 2 : vector<1x1x8xf32>, vector<1x1x8xf32>, vector<1x1x1xf32> -> vector<1x1x17xf32>
      %c0_34 = arith.constant 0 : index
      %c0_35 = arith.constant 0 : index
      %c0_36 = arith.constant 0 : index
      %34 = vector.load %arg6[%c0_34, %c0_35, %c0_36] : memref<1x1x17xf32, #tpu.memory_space<vmem>>, vector<1x1x17xf32>
      tpu.vector_store %arg6[%c0_34, %c0_35, %c0_36], %33 {strides = array<i32>} : memref<1x1x17xf32, #tpu.memory_space<vmem>>, vector<1x1x17xf32>,
    } else {
    }
    return
  }
  func.func @transform_0(%arg0: i32, %arg1: i32) -> (i32, i32, i32) {
    %c0_i32 = arith.constant 0 : i32
    %c0_i32_0 = arith.constant 0 : i32
    %c0_i32_1 = arith.constant 0 : i32
    return %arg0, %c0_i32, %c0_i32_0 : i32, i32, i32
  }
  func.func @transform_1(%arg0: i32, %arg1: i32) -> (i32, i32) {
    %c0_i32 = arith.constant 0 : i32
    %c0_i32_0 = arith.constant 0 : i32
    %c0_i32_1 = arith.constant 0 : i32
    return %c0_i32, %c0_i32_0 : i32, i32
  }
  func.func @transform_2(%arg0: i32, %arg1: i32) -> (i32, i32) {
    %c0_i32 = arith.constant 0 : i32
    %c0_i32_0 = arith.constant 0 : i32
    %c0_i32_1 = arith.constant 0 : i32
    return %c0_i32, %c0_i32_0 : i32, i32
  }
  func.func @transform_3(%arg0: i32, %arg1: i32) -> (i32, i32, i32) {
    %c0_i32 = arith.constant 0 : i32
    %c0_i32_0 = arith.constant 0 : i32
    return %arg0, %arg1, %c0_i32 : i32, i32, i32
  }
  func.func @transform_4(%arg0: i32, %arg1: i32) -> (i32, i32, i32) {
    %c0_i32 = arith.constant 0 : i32
    %c0_i32_0 = arith.constant 0 : i32
    %c0_i32_1 = arith.constant 0 : i32
    return %arg0, %c0_i32, %c0_i32_0 : i32, i32, i32
  }
}

</mosaic_0001>

<llo_original>
// kernel: tpu_custom_call.1
$region0: #{tpu_custom_call.1}
  #allocation0 [shape = 'u32[]', space=smem, size = 0x4, offset = 0x4, fixed_abs, tag = 'smem constant byte address 0x4 - core index']
  #allocation1 [shape = 'u32[72,128]{1,0:T(1,128)}', space=vmem, size = 0x9000, scoped, tag = 'internal scratch']
  #allocation2 [shape = 'f32[1,32,8]{2,1,0:T(8,128)}', space=vmem, size = 0x4000, scoped, tag = 'scratch operand']
  #allocation3 [shape = 'f32[1,1,32]{2,1,0:T(1,128)}', space=vmem, size = 0x200, scoped, tag = 'scratch operand']
  #allocation4 [shape = 'f32[1,1,8]{2,1,0:T(1,128)}', space=vmem, size = 0x200, scoped, tag = 'scratch operand']
  %s0 = inlined_call_operand.vmem [shape: f32[2,32,4], index: 0, kind: input, shape index: {}]
  %s1 = inlined_call_operand.vmem [shape: f32[4,8], index: 1, kind: input, shape index: {}]
  %s2 = inlined_call_operand.vmem [shape: f32[1,8], index: 2, kind: input, shape index: {}]
  %s3 = inlined_call_operand.vmem [shape: bf16[2,32,32], index: 3, kind: input, shape index: {}]
  %s4 = inlined_call_operand.hbm [shape: f32[2,1,17], index: 4, kind: output, shape index: {}]
  %s5 = sld [smem:[#allocation0]]
  $region57: #{tpu_custom_call.1} parent=0
    _
  %s7 = ssub.s32 1, %s5
  %s8 = scalar_select 0, %s7, %s5
  $region1: #{tpu_custom_call.1} parent=0
    #allocation5 [shape = 'u8[1024]{0}', space=vmem, size = 0x400, scoped, tag = 'output window, operand 0']
    #allocation6 [shape = 's32[2]{0}', space=sflag, size = 0x8, scoped, tag = 'scoped memory for tpu_custom_call.1']
    %9 = vsyncpa [#allocation6], 0
    %s10 = scalar_lea.sflag [#allocation6], 1
    %11 = vsyncpa %s10, 0
    loop: start=0, step=1, limit=6
    $region2: #{tpu_custom_call.1} parent=1 // loop_pre_header
      _
    $region3: #{tpu_custom_call.1} parent=1 // loop_header
      %s13 = sphi 0, %s17
      %p14 = scmp.ge.s32.totalorder %s13, 6
      %s20 = sphi 0, %s32
      %s21 = sphi 0, %s28
      %s22 = sphi 0, %s20
      %s23 = sphi 0, %s21
      %s24 = sphi 0, %s22
      %s25 = sphi 0, %s23
      %s35 = sphi 0, %s37
      %s38 = sphi 0, %s35
      %s39 = sphi 0, %s38
      %s55 = sphi 0, %s39
      %s59 = sphi 0, %s59
      %s61 = sphi 0, %s59
      %s62 = sphi 0, %s61
      %s76 = sphi 0, %s62
      %s80 = sphi 0, %s80
      %s82 = sphi 0, %s80
      %s83 = sphi 0, %s82
      %s97 = sphi 0, %s83
      %s105 = sphi 0, %s107
      %s108 = sphi 0, %s105
      %s109 = sphi 0, %s108
      %s125 = sphi 0, %s109
      %s131 = sphi 0, %s133
      %s134 = sphi 0, %s131
      %s135 = sphi 0, %s134
      %s151 = sphi 0, %s135
    $region4: #{tpu_custom_call.1} parent=1 // loop_header_branch
      %16 = sbr.rel (%p14) target = $region8
    $region5: #{tpu_custom_call.1} parent=1 // loop_body
      %s18 = ssub.s32 %s13, 1
      %s19 = ssub.s32 %s13, 2
      %s26 = sadd.s32 1, %s21
      %p27 = scmp.ge.s32.totalorder %s26, 2
      %s28 = scalar_select %p27, 0, %s26
      %s29 = sadd.s32 1, %s20
      %s30 = scalar_select %p27, %s29, %s20
      %p31 = scmp.ge.s32.totalorder %s30, 2
      %s32 = scalar_select %p31, 0, %s30
      %s33 = ssub.s32 %s20, %s32
      %p34 = scmp.eq.s32.totalorder %s33, 0
      %s36 = sadd.s32 %s35, 1
      %s37 = scalar_select %p34, %s35, %s36
      %p40 = pneg %p34
      %p41 = scmp.eq.s32.totalorder %s13, 3
      %p42 = por %p40, %p41
      %p43 = scmp.ne.s32.totalorder %s35, %s38
      %p44 = scmp.eq.s32.totalorder %s13, 0
      %p45 = por %p43, %p44
      %p46 = scmp.ne.s32.totalorder %s35, %s38
      %p47 = scmp.eq.s32.totalorder %s18, 3
      %p48 = por %p46, %p47
      %p49 = scmp.ne.s32.totalorder %s38, %s39
      %p50 = scmp.eq.s32.totalorder %s18, 0
      %p51 = por %p49, %p50
      %p52 = scmp.ne.s32.totalorder %s38, %s39
      %p53 = scmp.eq.s32.totalorder %s19, 3
      %p54 = por %p52, %p53
      %p56 = scmp.ne.s32.totalorder %s39, %s55
      %p57 = scmp.eq.s32.totalorder %s19, 0
      %p58 = por %p56, %p57
      %s60 = sadd.s32 %s59, 1
      %p63 = scmp.eq.s32.totalorder %s13, 3
      %p64 = scmp.ne.s32.totalorder %s59, %s61
      %p65 = scmp.eq.s32.totalorder %s13, 0
      %p66 = por %p64, %p65
      %p67 = scmp.ne.s32.totalorder %s59, %s61
      %p68 = scmp.eq.s32.totalorder %s18, 3
      %p69 = por %p67, %p68
      %p70 = scmp.ne.s32.totalorder %s61, %s62
      %p71 = scmp.eq.s32.totalorder %s18, 0
      %p72 = por %p70, %p71
      %p73 = scmp.ne.s32.totalorder %s61, %s62
      %p74 = scmp.eq.s32.totalorder %s19, 3
      %p75 = por %p73, %p74
      %p77 = scmp.ne.s32.totalorder %s62, %s76
      %p78 = scmp.eq.s32.totalorder %s19, 0
      %p79 = por %p77, %p78
      %s81 = sadd.s32 %s80, 1
      %p84 = scmp.eq.s32.totalorder %s13, 3
      %p85 = scmp.ne.s32.totalorder %s80, %s82
      %p86 = scmp.eq.s32.totalorder %s13, 0
      %p87 = por %p85, %p86
      %p88 = scmp.ne.s32.totalorder %s80, %s82
      %p89 = scmp.eq.s32.totalorder %s18, 3
      %p90 = por %p88, %p89
      %p91 = scmp.ne.s32.totalorder %s82, %s83
      %p92 = scmp.eq.s32.totalorder %s18, 0
      %p93 = por %p91, %p92
      %p94 = scmp.ne.s32.totalorder %s82, %s83
      %p95 = scmp.eq.s32.totalorder %s19, 3
      %p96 = por %p94, %p95
      %p98 = scmp.ne.s32.totalorder %s83, %s97
      %p99 = scmp.eq.s32.totalorder %s19, 0
      %p100 = por %p98, %p99
      %s101 = ssub.s32 %s20, %s32
      %s102 = ssub.s32 %s21, %s28
      %s103 = sor.u32 %s101, %s102
      %p104 = scmp.eq.s32.totalorder %s103, 0
      %s106 = sadd.s32 %s105, 1
      %s107 = scalar_select %p104, %s105, %s106
      %p110 = pneg %p104
      %p111 = scmp.eq.s32.totalorder %s13, 3
      %p112 = por %p110, %p111
      %p113 = scmp.ne.s32.totalorder %s105, %s108
      %p114 = scmp.eq.s32.totalorder %s13, 0
      %p115 = por %p113, %p114
      %p116 = scmp.ne.s32.totalorder %s105, %s108
      %p117 = scmp.eq.s32.totalorder %s18, 3
      %p118 = por %p116, %p117
      %p119 = scmp.ne.s32.totalorder %s108, %s109
      %p120 = scmp.eq.s32.totalorder %s18, 0
      %p121 = por %p119, %p120
      %p122 = scmp.ne.s32.totalorder %s108, %s109
      %p123 = scmp.eq.s32.totalorder %s19, 3
      %p124 = por %p122, %p123
      %p126 = scmp.ne.s32.totalorder %s109, %s125
      %p127 = scmp.eq.s32.totalorder %s19, 0
      %p128 = por %p126, %p127
      %s129 = ssub.s32 %s20, %s32
      %p130 = scmp.eq.s32.totalorder %s129, 0
      %s132 = sadd.s32 %s131, 1
      %s133 = scalar_select %p130, %s131, %s132
      %p136 = pneg %p130
      %p137 = scmp.eq.s32.totalorder %s13, 3
      %p138 = por %p136, %p137
      %p139 = scmp.ne.s32.totalorder %s131, %s134
      %p140 = scmp.eq.s32.totalorder %s13, 0
      %p141 = por %p139, %p140
      %p142 = scmp.ne.s32.totalorder %s131, %s134
      %p143 = scmp.eq.s32.totalorder %s18, 3
      %p144 = por %p142, %p143
      %p145 = scmp.ne.s32.totalorder %s134, %s135
      %p146 = scmp.eq.s32.totalorder %s18, 0
      %p147 = por %p145, %p146
      %p148 = scmp.ne.s32.totalorder %s134, %s135
      %p149 = scmp.eq.s32.totalorder %s19, 3
      %p150 = por %p148, %p149
      %p152 = scmp.ne.s32.totalorder %s135, %s151
      %p153 = scmp.eq.s32.totalorder %s19, 0
      %p154 = por %p152, %p153
      %p155 = scmp.le.s32.totalorder 1, %s13
      %p156 = scmp.lt.s32.totalorder %s13, 5
      %p157 = pnand %p155, %p156
      %p158 = pneg %p157
      // Predicated region
      $region9: #{tpu_custom_call.1} parent=5 // pred_check
        _
      $region10: #{tpu_custom_call.1} parent=5 // pred_check_branch
        %160 = sbr.rel (%p157) target = $region12
      $region11: #{tpu_custom_call.1} parent=5 // pred_region
        %s161 = ssub.s32 %s13, 1
        // Predicated region
        $region13: #{tpu_custom_call.1} parent=11 // pred_check
          %p162 = pneg %p72
        $region14: #{tpu_custom_call.1} parent=11 // pred_check_branch
          %164 = sbr.rel (%p162) target = $region16
        $region15: #{tpu_custom_call.1} parent=11 // pred_region
          _
        $region16: #{tpu_custom_call.1} parent=11 // pred_fallthru
          _
        // Predicated region
        $region17: #{tpu_custom_call.1} parent=11 // pred_check
          %p165 = pneg %p93
        $region18: #{tpu_custom_call.1} parent=11 // pred_check_branch
          %167 = sbr.rel (%p165) target = $region20
        $region19: #{tpu_custom_call.1} parent=11 // pred_region
          _
        $region20: #{tpu_custom_call.1} parent=11 // pred_fallthru
          _
      $region12: #{tpu_custom_call.1} parent=5 // pred_fallthru
        _
      %p168 = scmp.lt.s32.totalorder %s13, 4
      // Predicated region
      $region21: #{tpu_custom_call.1} parent=5 // pred_check
        %p169 = pneg %p168
      $region22: #{tpu_custom_call.1} parent=5 // pred_check_branch
        %171 = sbr.rel (%p169) target = $region24
      $region23: #{tpu_custom_call.1} parent=5 // pred_region
        // Predicated region
        $region25: #{tpu_custom_call.1} parent=23 // pred_check
          %p172 = pneg %p45
        $region26: #{tpu_custom_call.1} parent=23 // pred_check_branch
          %174 = sbr.rel (%p172) target = $region28
        $region27: #{tpu_custom_call.1} parent=23 // pred_region
          %p175 = scmp.lt.s32.totalorder %s20, 1
          %s176 = scalar_select %p175, %s20, 1
          %s177 = smul.addr %s176, 4
          %s178 = smul.addr %s177, 8
          %s179 = scalar_lea.vmem %s0, %s178
        $region28: #{tpu_custom_call.1} parent=23 // pred_fallthru
          _
        // Predicated region
        $region29: #{tpu_custom_call.1} parent=23 // pred_check
          %p180 = pneg %p115
        $region30: #{tpu_custom_call.1} parent=23 // pred_check_branch
          %182 = sbr.rel (%p180) target = $region32
        $region31: #{tpu_custom_call.1} parent=23 // pred_region
          %s183 = smul.u32 2, %s21
          %p184 = scmp.lt.s32.totalorder %s20, 1
          %s185 = scalar_select %p184, %s20, 1
          %p186 = scmp.lt.s32.totalorder %s183, 3
          %s187 = scalar_select %p186, %s183, 3
          %s188 = smul.addr %s185, 4
          %s189 = sadd.s32 %s187, %s188
          %s190 = smul.addr %s189, 4
          %s191 = scalar_lea.vmem %s3, %s190
          %s192 = smul.u32 2, %s21
        $region32: #{tpu_custom_call.1} parent=23 // pred_fallthru
          _
      $region24: #{tpu_custom_call.1} parent=5 // pred_fallthru
        _
      %p193 = scmp.le.s32.totalorder 1, %s13
      %p194 = scmp.lt.s32.totalorder %s13, 5
      %p195 = pnand %p193, %p194
      %p196 = pneg %p195
      // Predicated region
      $region33: #{tpu_custom_call.1} parent=5 // pred_check
        _
      $region34: #{tpu_custom_call.1} parent=5 // pred_check_branch
        %198 = sbr.rel (%p195) target = $region36
      $region35: #{tpu_custom_call.1} parent=5 // pred_region
        %s199 = ssub.s32 %s13, 1
        %p200 = scmp.lt.s32.totalorder %s22, 1
        %s201 = scalar_select %p200, %s22, 1
        %s202 = smul.addr %s201, 4
        %s203 = smul.addr %s202, 8
        %s204 = scalar_lea.vmem %s0, %s203
        %p205 = pneg %p51
        %p206 = pneg %p48
        %p207 = pneg %p72
        %p208 = pneg %p69
        %p209 = pneg %p93
        %p210 = pneg %p90
        %s211 = smul.u32 2, %s23
        %p212 = scmp.lt.s32.totalorder %s22, 1
        %s213 = scalar_select %p212, %s22, 1
        %p214 = scmp.lt.s32.totalorder %s211, 3
        %s215 = scalar_select %p214, %s211, 3
        %s216 = smul.addr %s213, 4
        %s217 = sadd.s32 %s215, %s216
        %s218 = smul.addr %s217, 4
        %s219 = scalar_lea.vmem %s3, %s218
        %p220 = pneg %p121
        %p221 = pneg %p118
        %p222 = pneg %p147
        %p223 = pneg %p144
        %s224 = sand.u32 %s134, 1
        %s225 = scalar_lea.sflag [#allocation6], %s224
        %s226 = sand.u32 %s134, 1
        %s227 = scalar_lea.vmem [#allocation5], %s226
        %p228 = scmp.lt.s32.totalorder %s22, 1
        %s229 = scalar_select %p228, %s22, 1
        %s230 = smul.addr %s229, 4
        %s231 = smul.addr %s230, 8
        %s232 = scalar_lea.vmem %s0, %s231
        %s233 = smul.u32 2, %s23
        %p234 = scmp.lt.s32.totalorder %s22, 1
        %s235 = scalar_select %p234, %s22, 1
        %p236 = scmp.lt.s32.totalorder %s233, 3
        %s237 = scalar_select %p236, %s233, 3
        %s238 = smul.addr %s235, 4
        %s239 = sadd.s32 %s237, %s238
        %s240 = smul.addr %s239, 4
        %s241 = scalar_lea.vmem %s3, %s240
        %s242 = smul.u32 2, %s23
        %p243 = scmp.eq.s32.totalorder %s23, 0
        // Predicated region
        $region37: #{tpu_custom_call.1} parent=35 // pred_check
          %p244 = pneg %p243
        $region38: #{tpu_custom_call.1} parent=35 // pred_check_branch
          %246 = sbr.rel (%p244) target = $region40
        $region39: #{tpu_custom_call.1} parent=35 // pred_region
          %v247 = vld [vmem:[%s232] sm:$0xff]
          %v248 = vld [vmem:[%s232 + $0x8] sm:$0xff]
          %v249 = vld [vmem:[%s232 + $0x10] sm:$0xff]
          %v250 = vld [vmem:[%s232 + $0x18] sm:$0xff]
          %v251 = vld [vmem:[%s1] sm:$0xf]
          %v252 = vld [vmem:[%s2] sm:$0x1]
          %v254 = vperm.slane %v252, 0
          %vm256 = vcmask 31744
          %v258 = vsel %vm256, %v247, 0
          %v261 = vsel %vm256, %v248, 0
          %v264 = vsel %vm256, %v249, 0
          %v267 = vsel %vm256, %v250, 0
          %vm269 = vcmask 1043456
          %v271 = vsel %vm269, %v251, 0
          %273 = vmatpush.msra.mxu0 0.0
          %274 = vmatpush.msra.mxu0 0.0
          %275 = vmatpush.msra.mxu0 0.0
          %276 = vmatpush.msra.mxu0 0.0
          %277 = vmatpush.msra.mxu0 0.0
          %278 = vmatpush.msra.mxu0 0.0
          %279 = vmatpush.msra.mxu0 0.0
          %280 = vmatpush.msra.mxu0 0.0
          %281 = vmatpush.msra.mxu0 0.0
          %282 = vmatpush.msra.mxu0 0.0
          %283 = vmatpush.msra.mxu0 0.0
          %284 = vmatpush.msra.mxu0 0.0
          %285 = vmatpush.msra.mxu0 0.0
          %286 = vmatpush.msra.mxu0 0.0
          %287 = vmatpush.msra.mxu0 0.0
          %288 = vmatpush.msra.mxu0 %v271
          %289 = vmatmul.f32.gmra.mxu0 %v258
          %v290 = vpop.f32.mrf.mxu0
          %v291 = vadd.f32 %v254, %v290
          %292 = vmatmul.f32.gmra.mxu0 %v261
          %v293 = vpop.f32.mrf.mxu0
          %v294 = vadd.f32 %v254, %v293
          %295 = vmatmul.f32.gmra.mxu0 %v264
          %v296 = vpop.f32.mrf.mxu0
          %v297 = vadd.f32 %v254, %v296
          %298 = vmatmul.f32.gmra.mxu0 %v267
          %v299 = vpop.f32.mrf.mxu0
          %v300 = vadd.f32 %v254, %v299
          %301 = vdwg.mxu0
          %vm302 = vcmask 64512
          %303 = vst.msk [vmem:[#allocation2] sm:$0xff] %vm302, %v291
          %304 = vst.msk [vmem:[#allocation2 + $0x8] sm:$0xff] %vm302, %v294
          %305 = vst.msk [vmem:[#allocation2 + $0x10] sm:$0xff] %vm302, %v297
          %306 = vst.msk [vmem:[#allocation2 + $0x18] sm:$0xff] %vm302, %v300
          %vm307 = vcmask 253952
          %308 = vst.msk [vmem:[#allocation3] sm:$0x1] %vm307, 0.0
          %vm309 = vcmask 57344
          %310 = vst.msk [vmem:[#allocation4] sm:$0x1] %vm309, 0.0
        $region40: #{tpu_custom_call.1} parent=35 // pred_fallthru
          _
        %v311 = vld [vmem:[%s241] sm:$0xf]
        %v312 = vld [vmem:[%s241 + $0x4] sm:$0xf]
        %v313 = vunpack.c.l.bf16 %v311
        %v314 = vunpack.c.l.bf16 %v312
        %v315 = vld [vmem:[#allocation3] sm:$0x1]
        %vm316 = vcmask 261120
        %v317 = vsel %vm316, %v313, 0.0
        %v318 = vsel %vm316, %v314, 0.0
        %v319 = vadd.f32 %v317, %v318
        %v320 = vrot.slane %v319, 4
        %v321 = vadd.f32 %v319, %v320
        %v322 = vrot.slane %v321, 2
        %v323 = vadd.f32 %v321, %v322
        %v324 = vrot.slane %v323, 1
        %v325 = vadd.f32 %v323, %v324
        %v326 = vadd.f32 %v315, %v325
        %vm327 = vcmask 253952
        %328 = vst.msk [vmem:[#allocation3] sm:$0x1] %vm327, %v326
        %s329 = smul.u32 %s23, 16
        %s330 = scalar_lea.vmem [#allocation2], %s329
        %v331 = vld [vmem:[%s330] sm:$0xff]
        %v332 = vld [vmem:[%s330 + $0x8] sm:$0xff]
        %333 = vadd.xlane.f32.xlu0 %v317
        %v334 = vpop.xlane.xlu0 %333
        %335 = vadd.xlane.f32.xlu0 %v318
        %v336 = vpop.xlane.xlu0 %335
        %v337 = vld [vmem:[#allocation4] sm:$0x1]
        %v338 = vmul.f32 %v334, %v331
        %v339 = vmul.f32 %v336, %v332
        %vm340 = vcmask 64512
        %v341 = vsel %vm340, %v338, 0.0
        %v342 = vsel %vm340, %v339, 0.0
        %v343 = vadd.f32 %v341, %v342
        %v344 = vrot.slane %v343, 4
        %v345 = vadd.f32 %v343, %v344
        %v346 = vrot.slane %v345, 2
        %v347 = vadd.f32 %v345, %v346
        %v348 = vrot.slane %v347, 1
        %v349 = vadd.f32 %v347, %v348
        %v350 = vadd.f32 %v337, %v349
        %vm351 = vcmask 57344
        %352 = vst.msk [vmem:[#allocation4] sm:$0x1] %vm351, %v350
        %p353 = scmp.eq.s32.totalorder %s23, 1
        // Predicated region
        $region41: #{tpu_custom_call.1} parent=35 // pred_check
          %p354 = pneg %p353
        $region42: #{tpu_custom_call.1} parent=35 // pred_check_branch
          %356 = sbr.rel (%p354) target = $region44
        $region43: #{tpu_custom_call.1} parent=35 // pred_region
          %v357 = vld [vmem:[#allocation3] sm:$0x1]
          %v358 = vld [vmem:[#allocation2] sm:$0xff]
          %v359 = vld [vmem:[#allocation2 + $0x8] sm:$0xff]
          %v360 = vld [vmem:[#allocation2 + $0x10] sm:$0xff]
          %v361 = vld [vmem:[#allocation2 + $0x18] sm:$0xff]
          %v363 = vsel %vm316, %v357, 0
          %365 = vmatpush.msra.mxu0 0.0
          %366 = vmatpush.msra.mxu0 0.0
          %367 = vmatpush.msra.mxu0 0.0
          %368 = vmatpush.msra.mxu0 0.0
          %369 = vmatpush.msra.mxu0 0.0
          %370 = vmatpush.msra.mxu0 0.0
          %371 = vmatpush.msra.mxu0 0.0
          %372 = vmatpush.msra.mxu0 0.0
          %373 = vmatpush.msra.mxu0 0.0
          %374 = vmatpush.msra.mxu0 0.0
          %375 = vmatpush.msra.mxu0 0.0
          %376 = vmatpush.msra.mxu0 0.0
          %377 = vmatpush.msra.mxu0 %v361
          %378 = vmatpush.msra.mxu0 %v360
          %379 = vmatpush.msra.mxu0 %v359
          %380 = vmatpush.msra.mxu0 %v358
          %381 = vmatmul.f32.gmra.mxu0 %v363
          %v382 = vpop.f32.mrf.mxu0
          %v383 = vadd.f32 0.0, %v382
          %384 = vdwg.mxu0
          %v385 = vld [vmem:[#allocation3] sm:$0x1]
          %v386 = vsel %vm327, %v385, 0.0
          %387 = vadd.xlane.f32.xlu0 %v386
          %v388 = vpop.xlane.xlu0 %387
          %v389 = vld [vmem:[#allocation4] sm:$0x1]
          %v391 = vperm.slane %v389, 0
          %392 = vrot.lane.b32.xlu0 %v391, 8
          %v393 = vpop.permute.xlu0 %392
          %v395 = vsel %vm340, %v383, %v393
          %vm396 = vcmask 130048
          %v397 = vsel %vm396, %v395, %v388
          %vm398 = vcmask 131072
          %399 = vst.msk [vmem:[%s227] sm:$0x1] %vm398, %v397
        $region44: #{tpu_custom_call.1} parent=35 // pred_fallthru
          _
        %s400 = sand.u32 %s134, 1
        %s401 = scalar_lea.sflag [#allocation6], %s400
        %s402 = sand.u32 %s134, 1
        %s403 = scalar_lea.vmem [#allocation5], %s402
        // Predicated region
        $region45: #{tpu_custom_call.1} parent=35 // pred_check
          %p404 = pneg %p144
        $region46: #{tpu_custom_call.1} parent=35 // pred_check_branch
          %406 = sbr.rel (%p404) target = $region48
        $region47: #{tpu_custom_call.1} parent=35 // pred_region
          %408 = vsyncadd %s401, 0
          %s409 = scalar_lea.hbm %s4, %s22
          %s411 = sshll.u32 %s403, 4
          %s412 = int_to_ptr.vmem [resolvable:$true] %s411
          %s413 = sshll.u32 %s409, 4
          %s414 = int_to_ptr.hbm [resolvable:$true] %s413
          %416 = dma.vmem_to_hbm [thread:$0]  %s412, 16, %s414, %s401
        $region48: #{tpu_custom_call.1} parent=35 // pred_fallthru
          _
      $region36: #{tpu_custom_call.1} parent=5 // pred_fallthru
        _
      %p417 = scmp.le.s32.totalorder 2, %s13
      // Predicated region
      $region49: #{tpu_custom_call.1} parent=5 // pred_check
        %p418 = pneg %p417
      $region50: #{tpu_custom_call.1} parent=5 // pred_check_branch
        %420 = sbr.rel (%p418) target = $region52
      $region51: #{tpu_custom_call.1} parent=5 // pred_region
        %s421 = ssub.s32 %s13, 2
        // Predicated region
        $region53: #{tpu_custom_call.1} parent=51 // pred_check
          %p422 = pneg %p150
        $region54: #{tpu_custom_call.1} parent=51 // pred_check_branch
          %424 = sbr.rel (%p422) target = $region56
        $region55: #{tpu_custom_call.1} parent=51 // pred_region
          %s425 = sand.u32 %s135, 1
          %s426 = scalar_lea.sflag [#allocation6], %s425
          %s427 = sand.u32 %s135, 1
          %s428 = scalar_lea.vmem [#allocation5], %s427
          %430 = dma.done %s426, 16
        $region56: #{tpu_custom_call.1} parent=51 // pred_fallthru
          _
      $region52: #{tpu_custom_call.1} parent=5 // pred_fallthru
        _
    $region6: #{tpu_custom_call.1} parent=1 // loop_footer
      %s17 = sadd.s32 1, %s13
    $region7: #{tpu_custom_call.1} parent=1 // loop_footer_branch
      %12 = sbr.rel target = $region3
    $region8: #{tpu_custom_call.1} parent=1 // loop_exit
      _
    %431 = vsyncpa [#allocation6], 1
    %s432 = scalar_lea.sflag [#allocation6], 1
    %433 = vsyncpa %s432, 1

</llo_original>
